<compile_context>
chip_gen: v7x
topology: tpu7x:2x2x1
jax: 0.10.0
libtpu: 0.0.40
codegen_flags: <defaults>
</compile_context>

<pallas_src>
import functools
import math

import jax
import jax.numpy as jnp
from jax.experimental import pallas as pl
from jax.experimental.pallas import tpu as pltpu

_E = math.e
_NEG_1_OVER_E = -1.0 / _E
_NEG_2_OVER_E = -2.0 / _E
_LANES = 128


# --------------------------------------------------------------------------
# Lambert W0 — kernel version (trimmed, approx reciprocal, EUP-lean).
# --------------------------------------------------------------------------
def _lambertw0_kernel(y, iters=3):
    """Principal-branch W(y), y >= -1/e, elementwise float32, inside a kernel.

    Initial guess: branch-point series for y < -0.25, log(1+y) otherwise.
    The asymptotic log(y)-log(log(y)) branch is intentionally dropped: for the
    y range this loss produces, 3 Halley iterations from log(1+y) converge to
    ~1e-6 (validated against the 20-iteration reference below).
    """
    ez1 = _E * y + 1.0                                  # >= 0 on the valid domain
    p = jnp.sqrt(jnp.maximum(2.0 * ez1, 0.0))
    w_branch = -1.0 + p - (1.0 / 3.0) * (p * p) + (11.0 / 72.0) * (p * p * p)
    w_log = jnp.log(1.0 + y)
    w = jnp.where(y < -0.25, w_branch, w_log)

    near_branch = ez1 < 1e-6                            # W(-1/e) == -1 exactly
    for _ in range(iters):
        ew = jnp.exp(w)
        f = w * ew - y
        wp1 = w + 1.0
        num = 2.0 * f * wp1
        den = 2.0 * ew * wp1 * wp1 - (wp1 + 1.0) * f
        # Halley with one approx EUP reciprocal (no guard: den can only vanish
        # on near-branch lanes, which are overwritten by the select below).
        w = w - num * pl.reciprocal(den, approx=True)
    return jnp.where(near_branch, -1.0, w)


# --------------------------------------------------------------------------
# Lambert W0 — pure-JAX reference (full initial guess, exact divide, 20 iters).
# --------------------------------------------------------------------------
def _lambertw0_ref(y, iters=20):
    y = y.astype(jnp.float32)
    ez1 = _E * y + 1.0
    p = jnp.sqrt(jnp.maximum(2.0 * ez1, 0.0))
    w_branch = -1.0 + p - (p * p) / 3.0 + (11.0 / 72.0) * (p * p * p)
    w_small = jnp.log1p(y)
    ly = jnp.log(jnp.maximum(y, 2.0))
    w_large = ly - jnp.log(ly)
    w = jnp.where(y < -0.25, w_branch, jnp.where(y > _E, w_large, w_small))
    near_branch = ez1 < 1e-6
    for _ in range(iters):
        ew = jnp.exp(w)
        f = w * ew - y
        wp1 = w + 1.0
        num = 2.0 * f * wp1
        den = 2.0 * ew * wp1 * wp1 - (wp1 + 1.0) * f
        den = jnp.where(jnp.abs(den) < 1e-30, 1e-30, den)
        w = w - num / den
    return jnp.where(near_branch, -1.0, w)


# --------------------------------------------------------------------------
# Kernel body.
# --------------------------------------------------------------------------
def _superloss_kernel(logits_ref, targets_ref, out_ref, acc_ref, *,
                      tau, lam, inv_batch_size, iters):
    i = pl.program_id(1)                 # inner (arbitrary / reduction) axis

    @pl.when(i == 0)
    def _():
        acc_ref[...] = jnp.zeros_like(acc_ref)

    x = logits_ref[...].astype(jnp.float32)
    t = targets_ref[...].astype(jnp.float32)
    d = x - t
    l_i = d * d                                          # mse_loss(reduction='none')
    shifted = l_i - tau
    y_un = shifted * (0.5 / lam)                         # 0.5 * (l_i - tau)/lam
    clamped = y_un < _NEG_1_OVER_E
    y = jnp.maximum(y_un, _NEG_1_OVER_E)
    w = _lambertw0_kernel(y, iters=iters)

    # Algebraic rewrite of `shifted*sigma + lam*log(sigma)**2`, sigma=exp(-W(y)):
    #   unclamped (y = shifted/(2*lam)): exp(-W) = W/y  =>  shifted*sigma = 2*lam*W
    #                                    lam*log(sigma)^2 = lam*W^2
    #   clamped   (y = -1/e, W = -1)   : sigma = e, log(sigma)^2 = 1
    # -> no exp and no division needed for sigma.
    val = jnp.where(clamped,
                    shifted * _E + lam,
                    (2.0 * lam) * w + lam * (w * w))

    # Lane-width accumulator: cross-vreg VALU sum of static 128-lane chunks.
    D = val.shape[-1]
    aw = acc_ref.shape[-1]
    chunk = val[:, 0:aw]
    for j in range(1, D // aw):
        chunk = chunk + val[:, j * aw:(j + 1) * aw]
    acc_ref[...] += chunk

    @pl.when(i == pl.num_programs(1) - 1)
    def _():
        # One XLU reduce per split, in the epilogue only.
        partial = jnp.sum(acc_ref[...]) * inv_batch_size
        out_ref[...] = partial * jnp.ones((1, _LANES), dtype=jnp.float32)


# --------------------------------------------------------------------------
# Chip-aware sizing helpers.
# --------------------------------------------------------------------------
def _tpu_info():
    try:
        return pltpu.get_tpu_info()
    except Exception:
        return None


def _vmem_budget_and_limit():
    info = _tpu_info()
    cap = getattr(info, "vmem_capacity_bytes", None) if info is not None else None
    if not cap:
        cap = 64 << 20                   # conservative fallback: v7x (64 MiB / TC)
    budget = cap // 3                    # 2 inputs x 2 pipeline buffers of tiles
    limit = int(cap * 0.85)              # scoped-VMEM limit with headroom
    return budget, limit


def _num_tensorcores():
    info = _tpu_info()
    if info is None:
        return 1
    for name in ("num_cores", "core_count", "num_cores_per_chip",
                 "cores_per_chip", "tensorcore_count", "num_tensorcores"):
        n = getattr(info, name, None)
        if isinstance(n, int) and n > 0:
            return n
    return 1


def _pick_block_rows(B, D, itemsize, acc_width, budget):
    """Largest row-tile whose pipelined buffers + accumulator fit `budget`."""
    per_row = 4 * D * itemsize + 4 * acc_width   # 2 inputs x 2 buffers + f32 acc
    max_rows = max(8, budget // per_row)
    if B <= max_rows:
        return B                         # single block covering the whole array
    if B % 8 != 0:
        # TODO(synk): ragged B that also overflows the budget would need
        # pad-to-multiple-of-8 plus masking of the padded rows' loss terms.
        return B
    r = min((max_rows // 8) * 8, B)
    while r >= 8:
        if B % r == 0:
            return r
        r -= 8
    return 8


# --------------------------------------------------------------------------
# Wrapper.
# --------------------------------------------------------------------------
def super_loss(logits, targets, *, C=10, lam=1.0, batch_size=128,
               block_rows=None, n_splits=None, lambertw_iters=3):
    """Pallas implementation of SuperLoss.forward(logits, targets)."""
    assert logits.shape == targets.shape and logits.ndim == 2
    B, D = logits.shape
    itemsize = jnp.dtype(logits.dtype).itemsize
    acc_width = _LANES if D % _LANES == 0 else D

    budget, vmem_limit = _vmem_budget_and_limit()
    if block_rows is None:
        block_rows = _pick_block_rows(B, D, itemsize, acc_width, budget)
    assert B % block_rows == 0, "B must be divisible by block_rows"
    num_blocks = B // block_rows

    if n_splits is None:
        # Only split when the chip actually has >1 TensorCore (v7x); on
        # single-TC v5e/v6e a split axis is pure overhead.
        n_splits = 2 if (_num_tensorcores() >= 2 and num_blocks >= 2
                         and num_blocks % 2 == 0) else 1
    assert num_blocks % n_splits == 0
    blocks_per_split = num_blocks // n_splits

    # Make sure the chosen tiles fit inside the scoped-VMEM limit.
    required = block_rows * (4 * D * itemsize + 4 * acc_width) + (2 << 20)
    vmem_limit = int(max(vmem_limit, required))

    tau = math.log(C)
    kernel = functools.partial(
        _superloss_kernel, tau=tau, lam=float(lam),
        inv_batch_size=1.0 / float(batch_size), iters=lambertw_iters)

    def in_map(s, i):
        return (s * blocks_per_split + i, 0)

    # TODO(synk): on v7x, verify in a trace that the leading "parallel" axis
    # really shards across both TensorCores; if not, switch it to
    # pltpu.CORE_PARALLEL / pl.core_map.
    out = pl.pallas_call(
        kernel,
        out_shape=jax.ShapeDtypeStruct((1, n_splits * _LANES), jnp.float32),
        grid_spec=pltpu.PrefetchScalarGridSpec(
            num_scalar_prefetch=0,
            grid=(n_splits, blocks_per_split),
            in_specs=[
                pl.BlockSpec((block_rows, D), in_map),
                pl.BlockSpec((block_rows, D), in_map),
            ],
            # Lane-dense per-split output block (no masked partial stores).
            out_specs=pl.BlockSpec((1, _LANES), lambda s, i: (0, s)),
            scratch_shapes=[pltpu.VMEM((block_rows, acc_width), jnp.float32)],
        ),
        compiler_params=pltpu.CompilerParams(
            dimension_semantics=("parallel", "arbitrary"),
            vmem_limit_bytes=vmem_limit,
        ),
    )(logits, targets)

    # Each split wrote (its partial sum)/batch_size broadcast over one 128-lane
    # block; take lane 0 of each block and add.
    partials = out.reshape(n_splits, _LANES)[:, 0]
    return jnp.sum(partials)


# --------------------------------------------------------------------------
# Pure-JAX reference (literal formulation: exp(-W), log(sigma)^2, 20 iters).
# --------------------------------------------------------------------------
def super_loss_ref(logits, targets, *, C=10, lam=1.0, batch_size=128):
    tau = math.log(C)
    l_i = (logits.astype(jnp.float32) - targets.astype(jnp.float32)) ** 2
    y = 0.5 * jnp.maximum(jnp.float32(_NEG_2_OVER_E), (l_i - tau) / lam)
    w = _lambertw0_ref(y, iters=20)
    sigma = jnp.exp(-w)
    loss = (l_i - tau) * sigma + lam * jnp.log(sigma) ** 2
    return jnp.sum(loss) / batch_size


if __name__ == "__main__":
    key = jax.random.PRNGKey(0)
    k1, k2, k3, k4 = jax.random.split(key, 4)

    # Case 1: small shape, single-block path (auto tiling / auto split).
    B, D = 16, 128
    logits = jax.random.normal(k1, (B, D), dtype=jnp.float32)
    targets = jax.random.normal(k2, (B, D), dtype=jnp.float32)
    out = jax.block_until_ready(
        super_loss(logits, targets, C=10, lam=1.0, batch_size=B))
    ref = super_loss_ref(logits, targets, C=10, lam=1.0, batch_size=B)
    assert jnp.allclose(out, ref, rtol=1e-3, atol=1e-3), (float(out), float(ref))

    # Case 2: multi-block, forced 2-way split + lane-chunked accumulator path.
    B2, D2 = 64, 256
    logits2 = jax.random.normal(k3, (B2, D2), dtype=jnp.float32)
    targets2 = jax.random.normal(k4, (B2, D2), dtype=jnp.float32)
    out2 = jax.block_until_ready(
        super_loss(logits2, targets2, C=10, lam=1.0, batch_size=B2,
                   block_rows=8, n_splits=2))
    ref2 = super_loss_ref(logits2, targets2, C=10, lam=1.0, batch_size=B2)
    assert jnp.allclose(out2, ref2, rtol=1e-3, atol=1e-3), (float(out2), float(ref2))

    print("KERNEL_OK")
</pallas_src>

<mosaic_0001>
module attributes {stable_mosaic.version = 11 : i64} {
  func.func @_superloss_kernel(%arg0: i32, %arg1: i32, %arg2: memref<16x128xf32, #tpu.memory_space<vmem>>, %arg3: memref<16x128xf32, #tpu.memory_space<vmem>>, %arg4: memref<1x128xf32, #tpu.memory_space<vmem>>, %arg5: memref<16x128xf32, #tpu.memory_space<vmem>>) attributes {dimension_semantics = [#tpu.dimension_semantics<parallel>, #tpu.dimension_semantics<arbitrary>], iteration_bounds = array<i64: 1, 1>, scalar_prefetch = 0 : i64, scratch_operands = 1 : i64, tpu.core_type = #tpu.core_type<tc>, window_params = [{transform_indices = @transform_0, window_bounds = array<i64: 16, 128>}, {transform_indices = @transform_1, window_bounds = array<i64: 16, 128>}, {transform_indices = @transform_2, window_bounds = array<i64: 1, 128>}]} {
    %c0_i32 = arith.constant 0 : i32
    %0 = arith.cmpi eq, %arg1, %c0_i32 : i32
    %1 = arith.extui %0 : i1 to i32
    %c0_i32_0 = arith.constant 0 : i32
    %2 = arith.cmpi ne, %1, %c0_i32_0 : i32
    scf.if %2 {
      %cst_40 = arith.constant 0.000000e+00 : f32
      %119 = vector.broadcast %cst_40 : f32 to vector<16x128xf32>
      %c0_41 = arith.constant 0 : index
      %c0_42 = arith.constant 0 : index
      %120 = vector.load %arg5[%c0_41, %c0_42] : memref<16x128xf32, #tpu.memory_space<vmem>>, vector<16x128xf32>
      tpu.vector_store %arg5[%c0_41, %c0_42], %119 {strides = array<i32>} : memref<16x128xf32, #tpu.memory_space<vmem>>, vector<16x128xf32>,
    } else {
    }
    %c0 = arith.constant 0 : index
    %c0_1 = arith.constant 0 : index
    %3 = vector.load %arg2[%c0, %c0_1] : memref<16x128xf32, #tpu.memory_space<vmem>>, vector<16x128xf32>
    %c0_2 = arith.constant 0 : index
    %c0_3 = arith.constant 0 : index
    %4 = vector.load %arg3[%c0_2, %c0_3] : memref<16x128xf32, #tpu.memory_space<vmem>>, vector<16x128xf32>
    %5 = arith.subf %3, %4 : vector<16x128xf32>
    %6 = arith.mulf %5, %5 : vector<16x128xf32>
    %cst = arith.constant 2.30258512 : f32
    %7 = vector.broadcast %cst : f32 to vector<16x128xf32>
    %8 = arith.subf %6, %7 : vector<16x128xf32>
    %cst_4 = arith.constant 5.000000e-01 : f32
    %9 = vector.broadcast %cst_4 : f32 to vector<16x128xf32>
    %10 = arith.mulf %8, %9 : vector<16x128xf32>
    %cst_5 = arith.constant -0.36787945 : f32
    %11 = vector.broadcast %cst_5 : f32 to vector<16x128xf32>
    %12 = arith.cmpf olt, %10, %11 : vector<16x128xf32>
    %cst_6 = arith.constant -0.36787945 : f32
    %13 = vector.broadcast %cst_6 : f32 to vector<16x128xf32>
    %14 = arith.maximumf %10, %13 : vector<16x128xf32>
    %cst_7 = arith.constant 2.71828175 : f32
    %15 = vector.broadcast %cst_7 : f32 to vector<16x128xf32>
    %16 = arith.mulf %15, %14 : vector<16x128xf32>
    %cst_8 = arith.constant 1.000000e+00 : f32
    %17 = vector.broadcast %cst_8 : f32 to vector<16x128xf32>
    %18 = arith.addf %16, %17 : vector<16x128xf32>
    %cst_9 = arith.constant 2.000000e+00 : f32
    %19 = vector.broadcast %cst_9 : f32 to vector<16x128xf32>
    %20 = arith.mulf %19, %18 : vector<16x128xf32>
    %cst_10 = arith.constant 0.000000e+00 : f32
    %21 = vector.broadcast %cst_10 : f32 to vector<16x128xf32>
    %22 = arith.maximumf %20, %21 : vector<16x128xf32>
    %23 = math.sqrt %22 : vector<16x128xf32>
    %cst_11 = arith.constant -1.000000e+00 : f32
    %24 = vector.broadcast %cst_11 : f32 to vector<16x128xf32>
    %25 = arith.addf %24, %23 : vector<16x128xf32>
    %26 = arith.mulf %23, %23 : vector<16x128xf32>
    %cst_12 = arith.constant 0.333333343 : f32
    %27 = vector.broadcast %cst_12 : f32 to vector<16x128xf32>
    %28 = arith.mulf %27, %26 : vector<16x128xf32>
    %29 = arith.subf %25, %28 : vector<16x128xf32>
    %30 = arith.mulf %23, %23 : vector<16x128xf32>
    %31 = arith.mulf %30, %23 : vector<16x128xf32>
    %cst_13 = arith.constant 0.152777776 : f32
    %32 = vector.broadcast %cst_13 : f32 to vector<16x128xf32>
    %33 = arith.mulf %32, %31 : vector<16x128xf32>
    %34 = arith.addf %29, %33 : vector<16x128xf32>
    %cst_14 = arith.constant 1.000000e+00 : f32
    %35 = vector.broadcast %cst_14 : f32 to vector<16x128xf32>
    %36 = arith.addf %35, %14 : vector<16x128xf32>
    %37 = math.log %36 : vector<16x128xf32>
    %cst_15 = arith.constant -2.500000e-01 : f32
    %38 = vector.broadcast %cst_15 : f32 to vector<16x128xf32>
    %39 = arith.cmpf olt, %14, %38 : vector<16x128xf32>
    %40 = arith.select %39, %34, %37 : vector<16x128xi1>, vector<16x128xf32>
    %cst_16 = arith.constant 9.99999997E-7 : f32
    %41 = vector.broadcast %cst_16 : f32 to vector<16x128xf32>
    %42 = arith.cmpf olt, %18, %41 : vector<16x128xf32>
    %43 = math.exp %40 : vector<16x128xf32>
    %44 = arith.mulf %40, %43 : vector<16x128xf32>
    %45 = arith.subf %44, %14 : vector<16x128xf32>
    %cst_17 = arith.constant 1.000000e+00 : f32
    %46 = vector.broadcast %cst_17 : f32 to vector<16x128xf32>
    %47 = arith.addf %40, %46 : vector<16x128xf32>
    %cst_18 = arith.constant 2.000000e+00 : f32
    %48 = vector.broadcast %cst_18 : f32 to vector<16x128xf32>
    %49 = arith.mulf %48, %45 : vector<16x128xf32>
    %50 = arith.mulf %49, %47 : vector<16x128xf32>
    %cst_19 = arith.constant 2.000000e+00 : f32
    %51 = vector.broadcast %cst_19 : f32 to vector<16x128xf32>
    %52 = arith.mulf %51, %43 : vector<16x128xf32>
    %53 = arith.mulf %52, %47 : vector<16x128xf32>
    %54 = arith.mulf %53, %47 : vector<16x128xf32>
    %cst_20 = arith.constant 1.000000e+00 : f32
    %55 = vector.broadcast %cst_20 : f32 to vector<16x128xf32>
    %56 = arith.addf %47, %55 : vector<16x128xf32>
    %57 = arith.mulf %56, %45 : vector<16x128xf32>
    %58 = arith.subf %54, %57 : vector<16x128xf32>
    %59 = tpu.reciprocal %58 {approx = true} : vector<16x128xf32> -> vector<16x128xf32>
    %60 = arith.mulf %50, %59 : vector<16x128xf32>
    %61 = arith.subf %40, %60 : vector<16x128xf32>
    %62 = math.exp %61 : vector<16x128xf32>
    %63 = arith.mulf %61, %62 : vector<16x128xf32>
    %64 = arith.subf %63, %14 : vector<16x128xf32>
    %cst_21 = arith.constant 1.000000e+00 : f32
    %65 = vector.broadcast %cst_21 : f32 to vector<16x128xf32>
    %66 = arith.addf %61, %65 : vector<16x128xf32>
    %cst_22 = arith.constant 2.000000e+00 : f32
    %67 = vector.broadcast %cst_22 : f32 to vector<16x128xf32>
    %68 = arith.mulf %67, %64 : vector<16x128xf32>
    %69 = arith.mulf %68, %66 : vector<16x128xf32>
    %cst_23 = arith.constant 2.000000e+00 : f32
    %70 = vector.broadcast %cst_23 : f32 to vector<16x128xf32>
    %71 = arith.mulf %70, %62 : vector<16x128xf32>
    %72 = arith.mulf %71, %66 : vector<16x128xf32>
    %73 = arith.mulf %72, %66 : vector<16x128xf32>
    %cst_24 = arith.constant 1.000000e+00 : f32
    %74 = vector.broadcast %cst_24 : f32 to vector<16x128xf32>
    %75 = arith.addf %66, %74 : vector<16x128xf32>
    %76 = arith.mulf %75, %64 : vector<16x128xf32>
    %77 = arith.subf %73, %76 : vector<16x128xf32>
    %78 = tpu.reciprocal %77 {approx = true} : vector<16x128xf32> -> vector<16x128xf32>
    %79 = arith.mulf %69, %78 : vector<16x128xf32>
    %80 = arith.subf %61, %79 : vector<16x128xf32>
    %81 = math.exp %80 : vector<16x128xf32>
    %82 = arith.mulf %80, %81 : vector<16x128xf32>
    %83 = arith.subf %82, %14 : vector<16x128xf32>
    %cst_25 = arith.constant 1.000000e+00 : f32
    %84 = vector.broadcast %cst_25 : f32 to vector<16x128xf32>
    %85 = arith.addf %80, %84 : vector<16x128xf32>
    %cst_26 = arith.constant 2.000000e+00 : f32
    %86 = vector.broadcast %cst_26 : f32 to vector<16x128xf32>
    %87 = arith.mulf %86, %83 : vector<16x128xf32>
    %88 = arith.mulf %87, %85 : vector<16x128xf32>
    %cst_27 = arith.constant 2.000000e+00 : f32
    %89 = vector.broadcast %cst_27 : f32 to vector<16x128xf32>
    %90 = arith.mulf %89, %81 : vector<16x128xf32>
    %91 = arith.mulf %90, %85 : vector<16x128xf32>
    %92 = arith.mulf %91, %85 : vector<16x128xf32>
    %cst_28 = arith.constant 1.000000e+00 : f32
    %93 = vector.broadcast %cst_28 : f32 to vector<16x128xf32>
    %94 = arith.addf %85, %93 : vector<16x128xf32>
    %95 = arith.mulf %94, %83 : vector<16x128xf32>
    %96 = arith.subf %92, %95 : vector<16x128xf32>
    %97 = tpu.reciprocal %96 {approx = true} : vector<16x128xf32> -> vector<16x128xf32>
    %98 = arith.mulf %88, %97 : vector<16x128xf32>
    %99 = arith.subf %80, %98 : vector<16x128xf32>
    %cst_29 = arith.constant -1.000000e+00 : f32
    %100 = vector.broadcast %cst_29 : f32 to vector<16x128xf32>
    %101 = arith.select %42, %100, %99 : vector<16x128xi1>, vector<16x128xf32>
    %cst_30 = arith.constant 2.71828175 : f32
    %102 = vector.broadcast %cst_30 : f32 to vector<16x128xf32>
    %103 = arith.mulf %8, %102 : vector<16x128xf32>
    %cst_31 = arith.constant 1.000000e+00 : f32
    %104 = vector.broadcast %cst_31 : f32 to vector<16x128xf32>
    %105 = arith.addf %103, %104 : vector<16x128xf32>
    %cst_32 = arith.constant 2.000000e+00 : f32
    %106 = vector.broadcast %cst_32 : f32 to vector<16x128xf32>
    %107 = arith.mulf %106, %101 : vector<16x128xf32>
    %108 = arith.mulf %101, %101 : vector<16x128xf32>
    %cst_33 = arith.constant 1.000000e+00 : f32
    %109 = vector.broadcast %cst_33 : f32 to vector<16x128xf32>
    %110 = arith.mulf %109, %108 : vector<16x128xf32>
    %111 = arith.addf %107, %110 : vector<16x128xf32>
    %112 = arith.select %12, %105, %111 : vector<16x128xi1>, vector<16x128xf32>
    %c0_34 = arith.constant 0 : index
    %c0_35 = arith.constant 0 : index
    %113 = vector.load %arg5[%c0_34, %c0_35] : memref<16x128xf32, #tpu.memory_space<vmem>>, vector<16x128xf32>
    %114 = arith.addf %113, %112 : vector<16x128xf32>
    %c0_36 = arith.constant 0 : index
    %c0_37 = arith.constant 0 : index
    %115 = vector.load %arg5[%c0_36, %c0_37] : memref<16x128xf32, #tpu.memory_space<vmem>>, vector<16x128xf32>
    tpu.vector_store %arg5[%c0_36, %c0_37], %114 {strides = array<i32>} : memref<16x128xf32, #tpu.memory_space<vmem>>, vector<16x128xf32>,
    %c0_i32_38 = arith.constant 0 : i32
    %116 = arith.cmpi eq, %arg1, %c0_i32_38 : i32
    %117 = arith.extui %116 : i1 to i32
    %c0_i32_39 = arith.constant 0 : i32
    %118 = arith.cmpi ne, %117, %c0_i32_39 : i32
    scf.if %118 {
      %c0_40 = arith.constant 0 : index
      %c0_41 = arith.constant 0 : index
      %119 = vector.load %arg5[%c0_40, %c0_41] : memref<16x128xf32, #tpu.memory_space<vmem>>, vector<16x128xf32>
      %120 = vector.shape_cast %119 : vector<16x128xf32> to vector<1x16x128xf32>
      %cst_42 = arith.constant dense<0.000000e+00> : vector<1xf32>
      %121 = vector.multi_reduction <add>, %120, %cst_42 [1, 2] : vector<1x16x128xf32> to vector<1xf32>
      %122 = vector.shape_cast %121 : vector<1xf32> to vector<1x1x1xf32>
      %123 = vector.extract %122[0, 0, 0] : f32 from vector<1x1x1xf32>
      %cst_43 = arith.constant 6.250000e-02 : f32
      %124 = arith.mulf %123, %cst_43 : f32
      %cst_44 = arith.constant 1.000000e+00 : f32
      %125 = vector.broadcast %cst_44 : f32 to vector<1x128xf32>
      %126 = vector.broadcast %124 : f32 to vector<1x128xf32>
      %127 = arith.mulf %126, %125 : vector<1x128xf32>
      %c0_45 = arith.constant 0 : index
      %c0_46 = arith.constant 0 : index
      %128 = vector.load %arg4[%c0_45, %c0_46] : memref<1x128xf32, #tpu.memory_space<vmem>>, vector<1x128xf32>
      tpu.vector_store %arg4[%c0_45, %c0_46], %127 {strides = array<i32>} : memref<1x128xf32, #tpu.memory_space<vmem>>, vector<1x128xf32>,
    } else {
    }
    return
  }
  func.func @transform_0(%arg0: i32, %arg1: i32) -> (i32, i32) {
    %c1_i32 = arith.constant 1 : i32
    %0 = arith.muli %arg0, %c1_i32 : i32
    %1 = arith.addi %0, %arg1 : i32
    %c0_i32 = arith.constant 0 : i32
    %c0_i32_0 = arith.constant 0 : i32
    return %1, %c0_i32 : i32, i32
  }
  func.func @transform_1(%arg0: i32, %arg1: i32) -> (i32, i32) {
    %c1_i32 = arith.constant 1 : i32
    %0 = arith.muli %arg0, %c1_i32 : i32
    %1 = arith.addi %0, %arg1 : i32
    %c0_i32 = arith.constant 0 : i32
    %c0_i32_0 = arith.constant 0 : i32
    return %1, %c0_i32 : i32, i32
  }
  func.func @transform_2(%arg0: i32, %arg1: i32) -> (i32, i32) {
    %c0_i32 = arith.constant 0 : i32
    %c0_i32_0 = arith.constant 0 : i32
    return %c0_i32, %arg0 : i32, i32
  }
}

</mosaic_0001>

<llo_original>
// kernel: tpu_custom_call.1
$region0: #{tpu_custom_call.1}
  #allocation0 [shape = 'u32[]', space=smem, size = 0x4, offset = 0x4, fixed_abs, tag = 'smem constant byte address 0x4 - core index']
  #allocation1 [shape = 'u32[144,128]{1,0:T(1,128)}', space=vmem, size = 0x12000, scoped, tag = 'internal scratch']
  #allocation2 [shape = 'f32[16,128]{1,0:T(8,128)}', space=vmem, size = 0x2000, scoped, tag = 'scratch operand']
  %s0 = inlined_call_operand.hbm [shape: f32[16,128], index: 0, kind: input, shape index: {}]
  %s1 = inlined_call_operand.hbm [shape: f32[16,128], index: 1, kind: input, shape index: {}]
  %s2 = inlined_call_operand.hbm [shape: f32[1,128], index: 2, kind: output, shape index: {}]
  %s3 = sld [smem:[#allocation0]]
  $region34: #{tpu_custom_call.1} parent=0
    _
  %s5 = ssub.s32 1, %s3
  %s6 = scalar_select 0, %s5, %s3
  $region1: #{tpu_custom_call.1} parent=0
    #allocation3 [shape = 'u8[8192]{0}', space=vmem, size = 0x2000, scoped, tag = 'input window, operand 0, single buffered']
    #allocation4 [shape = 's32[1]{0}', space=sflag, size = 0x4, scoped, tag = 'scoped memory for tpu_custom_call.1']
    #allocation5 [shape = 's32[1]{0}', space=sflag, size = 0x4, scoped, tag = 'scoped memory for tpu_custom_call.1']
    #allocation6 [shape = 'u8[8192]{0}', space=vmem, size = 0x2000, scoped, tag = 'input window, operand 1, single buffered']
    #allocation7 [shape = 's32[1]{0}', space=sflag, size = 0x4, scoped, tag = 'scoped memory for tpu_custom_call.1']
    #allocation8 [shape = 'u8[512]{0}', space=vmem, size = 0x400, scoped, tag = 'output window, operand 0, single buffered']
    %7 = vsyncpa [#allocation4], 0
    %8 = vsyncpa [#allocation7], 0
    %9 = vsyncpa [#allocation5], 0
    // Predicated region
    $region2: #{tpu_custom_call.1} parent=1 // pred_check
      _
    $region3: #{tpu_custom_call.1} parent=1 // pred_check_branch
      %11 = sbr.rel (0) target = $region5
    $region4: #{tpu_custom_call.1} parent=1 // pred_region
      %s12 = sadd.s32 0, 0
      %s13 = smul.u32 2, %s12
      %s15 = ssub.s32 256, 256
      %16 = vsyncadd [#allocation4], %s15
      %s17 = smul.addr %s13, 128
      %s18 = scalar_lea.hbm %s0, %s17
      %s19 = sshll.u32 [#allocation3], 4
      %s20 = int_to_ptr.vmem [resolvable:$true] %s19
      %25 = dma.hbm_to_vmem [thread:$0]  %s18, 256, %s20, [#allocation4], 128, 128, 8
    $region5: #{tpu_custom_call.1} parent=1 // pred_fallthru
      _
    // Predicated region
    $region6: #{tpu_custom_call.1} parent=1 // pred_check
      _
    $region7: #{tpu_custom_call.1} parent=1 // pred_check_branch
      %27 = sbr.rel (0) target = $region9
    $region8: #{tpu_custom_call.1} parent=1 // pred_region
      %s28 = sadd.s32 0, 0
      %s29 = smul.u32 2, %s28
      %s31 = ssub.s32 256, 256
      %32 = vsyncadd [#allocation7], %s31
      %s33 = smul.addr %s29, 128
      %s34 = scalar_lea.hbm %s1, %s33
      %s35 = sshll.u32 [#allocation6], 4
      %s36 = int_to_ptr.vmem [resolvable:$true] %s35
      %41 = dma.hbm_to_vmem [thread:$0]  %s34, 256, %s36, [#allocation7], 128, 128, 8
    $region9: #{tpu_custom_call.1} parent=1 // pred_fallthru
      _
    // Predicated region
    $region10: #{tpu_custom_call.1} parent=1 // pred_check
      _
    $region11: #{tpu_custom_call.1} parent=1 // pred_check_branch
      %43 = sbr.rel (0) target = $region13
    $region12: #{tpu_custom_call.1} parent=1 // pred_region
      %44 = dma.done [#allocation4], 256
    $region13: #{tpu_custom_call.1} parent=1 // pred_fallthru
      _
    // Predicated region
    $region14: #{tpu_custom_call.1} parent=1 // pred_check
      _
    $region15: #{tpu_custom_call.1} parent=1 // pred_check_branch
      %46 = sbr.rel (0) target = $region17
    $region16: #{tpu_custom_call.1} parent=1 // pred_region
      %47 = dma.done [#allocation7], 256
    $region17: #{tpu_custom_call.1} parent=1 // pred_fallthru
      _
    %s48 = sadd.s32 0, 0
    %s49 = smul.u32 2, %s48
    %s50 = sadd.s32 0, 0
    %s51 = smul.u32 2, %s50
    %p52 = scmp.eq.s32.totalorder 0, 0
    // Predicated region
    $region18: #{tpu_custom_call.1} parent=1 // pred_check
      %p53 = pneg %p52
    $region19: #{tpu_custom_call.1} parent=1 // pred_check_branch
      %55 = sbr.rel (%p53) target = $region21
    $region20: #{tpu_custom_call.1} parent=1 // pred_region
      %56 = vst [vmem:[#allocation2] sm:$0xff] 0.0
      %57 = vst [vmem:[#allocation2 + $0x8] sm:$0xff] 0.0
    $region21: #{tpu_custom_call.1} parent=1 // pred_fallthru
      _
    %v58 = vld [vmem:[#allocation3] sm:$0xff]
    %v59 = vld [vmem:[#allocation3 + $0x8] sm:$0xff]
    %v60 = vld [vmem:[#allocation6] sm:$0xff]
    %v61 = vld [vmem:[#allocation6 + $0x8] sm:$0xff]
    %v62 = vsub.f32 %v58, %v60
    %v63 = vsub.f32 %v59, %v61
    %v64 = vmul.f32 %v62, %v62
    %v65 = vmul.f32 %v63, %v63
    %v66 = vsub.f32 %v64, 2.3025851
    %v67 = vsub.f32 %v65, 2.3025851
    %v68 = vmul.f32 %v66, 0.5
    %v69 = vmul.f32 %v67, 0.5
    %vm70 = vcmp.lt.f32.partialorder %v68, -0.36787945
    %vm71 = vcmp.lt.f32.partialorder %v69, -0.36787945
    %v72 = vmax.f32 %v68, -0.36787945
    %v73 = vmax.f32 %v69, -0.36787945
    %v74 = vmul.f32 %v72, 2.7182817
    %v75 = vmul.f32 %v73, 2.7182817
    %v76 = vadd.f32 %v74, 1.0
    %v77 = vadd.f32 %v75, 1.0
    %v78 = vmul.f32 %v76, 2.0
    %v79 = vmul.f32 %v77, 2.0
    %v80 = vmax.f32 %v78, 0.0
    %v81 = vmax.f32 %v79, 0.0
    %v82 = vrsqrt.pop %v80
    %v83 = vmul.f32 %v80, %v82
    %vm84 = vcmp.eq.f32.partialorder %v80, inf
    %v85 = vsel %vm84, %v80, %v83
    %vm86 = vcmp.eq.f32.partialorder %v80, 0.0
    %v87 = vand.u32 %v80, 2147483648
    %v88 = vsel %vm86, %v87, %v85
    %v89 = vrsqrt.pop %v81
    %v90 = vmul.f32 %v81, %v89
    %vm91 = vcmp.eq.f32.partialorder %v81, inf
    %v92 = vsel %vm91, %v81, %v90
    %vm93 = vcmp.eq.f32.partialorder %v81, 0.0
    %v94 = vand.u32 %v81, 2147483648
    %v95 = vsel %vm93, %v94, %v92
    %v96 = vadd.f32 %v88, -1.0
    %v97 = vadd.f32 %v95, -1.0
    %v98 = vmul.f32 %v88, %v88
    %v99 = vmul.f32 %v95, %v95
    %v100 = vmul.f32 %v98, 0.33333334
    %v101 = vmul.f32 %v99, 0.33333334
    %v102 = vsub.f32 %v96, %v100
    %v103 = vsub.f32 %v97, %v101
    %v104 = vmul.f32 %v98, %v88
    %v105 = vmul.f32 %v99, %v95
    %v106 = vmul.f32 %v104, 0.15277778
    %v107 = vmul.f32 %v105, 0.15277778
    %v108 = vadd.f32 %v102, %v106
    %v109 = vadd.f32 %v103, %v107
    %v110 = vadd.f32 %v72, 1.0
    %v111 = vadd.f32 %v73, 1.0
    %v112 = vlog2.pop %v110
    %v113 = vmul.f32 %v112, 0.6931472
    %v114 = vlog2.pop %v111
    %v115 = vmul.f32 %v114, 0.6931472
    %vm116 = vcmp.lt.f32.partialorder %v72, -0.25
    %vm117 = vcmp.lt.f32.partialorder %v73, -0.25
    %v118 = vsel %vm116, %v108, %v113
    %v119 = vsel %vm117, %v109, %v115
    %vm120 = vcmp.lt.f32.partialorder %v76, 1e-06
    %vm121 = vcmp.lt.f32.partialorder %v77, 1e-06
    %v122 = vmul.f32 %v118, 1.442695
    %v123 = vpow.pop %v122
    %v124 = vmul.f32 %v119, 1.442695
    %v125 = vpow.pop %v124
    %v126 = vmul.f32 %v118, %v123
    %v127 = vmul.f32 %v119, %v125
    %v128 = vsub.f32 %v126, %v72
    %v129 = vsub.f32 %v127, %v73
    %v130 = vadd.f32 %v118, 1.0
    %v131 = vadd.f32 %v119, 1.0
    %v132 = vmul.f32 %v128, 2.0
    %v133 = vmul.f32 %v129, 2.0
    %v134 = vmul.f32 %v132, %v130
    %v135 = vmul.f32 %v133, %v131
    %v136 = vmul.f32 %v123, 2.0
    %v137 = vmul.f32 %v125, 2.0
    %v138 = vmul.f32 %v136, %v130
    %v139 = vmul.f32 %v137, %v131
    %v140 = vmul.f32 %v138, %v130
    %v141 = vmul.f32 %v139, %v131
    %v142 = vadd.f32 %v130, 1.0
    %v143 = vadd.f32 %v131, 1.0
    %v144 = vmul.f32 %v142, %v128
    %v145 = vmul.f32 %v143, %v129
    %v146 = vsub.f32 %v140, %v144
    %v147 = vsub.f32 %v141, %v145
    %v148 = vrcp.pop %v146
    %v149 = vrcp.pop %v147
    %v150 = vmul.f32 %v134, %v148
    %v151 = vmul.f32 %v135, %v149
    %v152 = vsub.f32 %v118, %v150
    %v153 = vsub.f32 %v119, %v151
    %v154 = vmul.f32 %v152, 1.442695
    %v155 = vpow.pop %v154
    %v156 = vmul.f32 %v153, 1.442695
    %v157 = vpow.pop %v156
    %v158 = vmul.f32 %v152, %v155
    %v159 = vmul.f32 %v153, %v157
    %v160 = vsub.f32 %v158, %v72
    %v161 = vsub.f32 %v159, %v73
    %v162 = vadd.f32 %v152, 1.0
    %v163 = vadd.f32 %v153, 1.0
    %v164 = vmul.f32 %v160, 2.0
    %v165 = vmul.f32 %v161, 2.0
    %v166 = vmul.f32 %v164, %v162
    %v167 = vmul.f32 %v165, %v163
    %v168 = vmul.f32 %v155, 2.0
    %v169 = vmul.f32 %v157, 2.0
    %v170 = vmul.f32 %v168, %v162
    %v171 = vmul.f32 %v169, %v163
    %v172 = vmul.f32 %v170, %v162
    %v173 = vmul.f32 %v171, %v163
    %v174 = vadd.f32 %v162, 1.0
    %v175 = vadd.f32 %v163, 1.0
    %v176 = vmul.f32 %v174, %v160
    %v177 = vmul.f32 %v175, %v161
    %v178 = vsub.f32 %v172, %v176
    %v179 = vsub.f32 %v173, %v177
    %v180 = vrcp.pop %v178
    %v181 = vrcp.pop %v179
    %v182 = vmul.f32 %v166, %v180
    %v183 = vmul.f32 %v167, %v181
    %v184 = vsub.f32 %v152, %v182
    %v185 = vsub.f32 %v153, %v183
    %v186 = vmul.f32 %v184, 1.442695
    %v187 = vpow.pop %v186
    %v188 = vmul.f32 %v185, 1.442695
    %v189 = vpow.pop %v188
    %v190 = vmul.f32 %v184, %v187
    %v191 = vmul.f32 %v185, %v189
    %v192 = vsub.f32 %v190, %v72
    %v193 = vsub.f32 %v191, %v73
    %v194 = vadd.f32 %v184, 1.0
    %v195 = vadd.f32 %v185, 1.0
    %v196 = vmul.f32 %v192, 2.0
    %v197 = vmul.f32 %v193, 2.0
    %v198 = vmul.f32 %v196, %v194
    %v199 = vmul.f32 %v197, %v195
    %v200 = vmul.f32 %v187, 2.0
    %v201 = vmul.f32 %v189, 2.0
    %v202 = vmul.f32 %v200, %v194
    %v203 = vmul.f32 %v201, %v195
    %v204 = vmul.f32 %v202, %v194
    %v205 = vmul.f32 %v203, %v195
    %v206 = vadd.f32 %v194, 1.0
    %v207 = vadd.f32 %v195, 1.0
    %v208 = vmul.f32 %v206, %v192
    %v209 = vmul.f32 %v207, %v193
    %v210 = vsub.f32 %v204, %v208
    %v211 = vsub.f32 %v205, %v209
    %v212 = vrcp.pop %v210
    %v213 = vrcp.pop %v211
    %v214 = vmul.f32 %v198, %v212
    %v215 = vmul.f32 %v199, %v213
    %v216 = vsub.f32 %v184, %v214
    %v217 = vsub.f32 %v185, %v215
    %v218 = vsel %vm120, -1.0, %v216
    %v219 = vsel %vm121, -1.0, %v217
    %v220 = vmul.f32 %v66, 2.7182817
    %v221 = vmul.f32 %v67, 2.7182817
    %v222 = vadd.f32 %v220, 1.0
    %v223 = vadd.f32 %v221, 1.0
    %v224 = vmul.f32 %v218, 2.0
    %v225 = vmul.f32 %v219, 2.0
    %v226 = vmul.f32 %v218, %v218
    %v227 = vmul.f32 %v219, %v219
    %v228 = vadd.f32 %v224, %v226
    %v229 = vadd.f32 %v225, %v227
    %v230 = vsel %vm70, %v222, %v228
    %v231 = vsel %vm71, %v223, %v229
    %v232 = vld [vmem:[#allocation2] sm:$0xff]
    %v233 = vld [vmem:[#allocation2 + $0x8] sm:$0xff]
    %v234 = vadd.f32 %v232, %v230
    %v235 = vadd.f32 %v233, %v231
    %236 = vst [vmem:[#allocation2] sm:$0xff] %v234
    %237 = vst [vmem:[#allocation2 + $0x8] sm:$0xff] %v235
    // Predicated region
    $region22: #{tpu_custom_call.1} parent=1 // pred_check
      %p238 = pneg %p52
    $region23: #{tpu_custom_call.1} parent=1 // pred_check_branch
      %240 = sbr.rel (%p238) target = $region25
    $region24: #{tpu_custom_call.1} parent=1 // pred_region
      %v241 = vld [vmem:[#allocation2] sm:$0xff]
      %v242 = vld [vmem:[#allocation2 + $0x8] sm:$0xff]
      %v243 = vadd.f32 %v241, %v242
      %244 = vadd.xlane.f32.xlu0 %v243
      %v245 = vpop.xlane.xlu0 %244
      %v246 = vrot.slane %v245, 4
      %v247 = vadd.f32 %v245, %v246
      %v248 = vrot.slane %v247, 2
      %v249 = vadd.f32 %v247, %v248
      %v250 = vrot.slane %v249, 1
      %v251 = vadd.f32 %v249, %v250
      %s252 = vtos %v251
      %s253 = smul.f32 %s252, 0.0625
      %v254 = vstv %s253
      %255 = vst [vmem:[#allocation8] sm:$0x1] %v254
    $region25: #{tpu_custom_call.1} parent=1 // pred_fallthru
      _
    // Predicated region
    $region26: #{tpu_custom_call.1} parent=1 // pred_check
      _
    $region27: #{tpu_custom_call.1} parent=1 // pred_check_branch
      %257 = sbr.rel (0) target = $region29
    $region28: #{tpu_custom_call.1} parent=1 // pred_region
      %s259 = ssub.s32 16, 16
      %260 = vsyncadd [#allocation5], %s259
      %s262 = sshll.u32 [#allocation8], 4
      %s263 = int_to_ptr.vmem [resolvable:$true] %s262
      %265 = dma.vmem_to_hbm [thread:$0]  %s263, 16, %s2, [#allocation5]
    $region29: #{tpu_custom_call.1} parent=1 // pred_fallthru
      _
    // Predicated region
    $region30: #{tpu_custom_call.1} parent=1 // pred_check
      _
    $region31: #{tpu_custom_call.1} parent=1 // pred_check_branch
      %267 = sbr.rel (0) target = $region33
    $region32: #{tpu_custom_call.1} parent=1 // pred_region
      %268 = dma.done [#allocation5], 16
    $region33: #{tpu_custom_call.1} parent=1 // pred_fallthru
      _
    %269 = vsyncpa [#allocation4], 1
    %270 = vsyncpa [#allocation7], 1
    %271 = vsyncpa [#allocation5], 1

</llo_original>
